<compile_context>
chip_gen: v5e
topology: v5e:2x2
jax: 0.10.0
libtpu: 0.0.40
codegen_flags: <defaults>
</compile_context>

<pallas_src>
import functools

import jax
import jax.numpy as jnp
from jax.experimental import pallas as pl
from jax.experimental.pallas import tpu as pltpu

BN_EPS = 1e-5  # PyTorch BatchNorm1d default


# --------------------------------------------------------------------------------------
# Fused residual-block kernel. One grid step == one batch element, full (C, L) tile.
# --------------------------------------------------------------------------------------
def _resblock_kernel(x_ref, w1a_ref, b1a_ref, w2_ref, b2_ref, o_ref, *, K, pad, C_half):
    x = x_ref[0]                                                   # (C, L) f32
    C, L = x.shape

    # --- fused 1x1 convs: [conv1+BN1 ; attention] in one MXU pass over x ---
    y = jnp.dot(w1a_ref[...], x, preferred_element_type=jnp.float32) + b1a_ref[...]
    h = jnp.maximum(y[:C_half], 0.0)                               # (C/2, L) conv1+BN1+ReLU
    att = jax.nn.sigmoid(y[C_half:])                               # (C, L)   attention gate

    # --- conv2 (kernel K, 'same', stride 1) + folded BN2 + ReLU, as ONE matmul ---
    lane = jax.lax.broadcasted_iota(jnp.int32, h.shape, 1)
    taps = []
    for t in range(K):                                             # static unroll
        off = t - pad                                              # tap reads h[:, l + off]
        if off == 0:
            ht = h
        elif off < 0:
            ht = pltpu.roll(h, shift=-off, axis=1)                 # out[l] = h[l + off]
            ht = jnp.where(lane < -off, 0.0, ht)                   # zero-pad left edge
        else:
            ht = pltpu.roll(h, shift=(L - off) % L, axis=1)        # out[l] = h[l + off]
            ht = jnp.where(lane >= L - off, 0.0, ht)               # zero-pad right edge
        taps.append(ht)
    hcat = jnp.concatenate(taps, axis=0)                           # (K*C/2, L)
    conv_out = jnp.maximum(
        jnp.dot(w2_ref[...], hcat, preferred_element_type=jnp.float32) + b2_ref[...],
        0.0)                                                       # (C, L)

    # --- gated residual (DropPath == identity at inference) ---
    o_ref[0] = (x * att + conv_out).astype(o_ref.dtype)


def resblock_forward(kp, x):
    """kp: folded/stacked kernel params. x: (B, C, L) float32."""
    B, C, L = x.shape
    C_half = kp["W1a"].shape[0] - C
    K = kp["W2"].shape[1] // C_half
    pad = (K - 1) // 2                                             # 'same' padding, stride 1

    kernel = functools.partial(_resblock_kernel, K=K, pad=pad, C_half=C_half)
    return pl.pallas_call(
        kernel,
        out_shape=jax.ShapeDtypeStruct((B, C, L), x.dtype),
        grid_spec=pltpu.PrefetchScalarGridSpec(
            num_scalar_prefetch=0,
            grid=(B,),
            in_specs=[
                pl.BlockSpec((1, C, L),          lambda b: (b, 0, 0)),   # x
                pl.BlockSpec((C_half + C, C),    lambda b: (0, 0)),      # [W1 ; Wa] stacked
                pl.BlockSpec((C_half + C, 1),    lambda b: (0, 0)),      # [b1 ; ba]
                pl.BlockSpec((C, K * C_half),    lambda b: (0, 0)),      # W2 tap-stacked
                pl.BlockSpec((C, 1),             lambda b: (0, 0)),      # b2
            ],
            out_specs=pl.BlockSpec((1, C, L), lambda b: (b, 0, 0)),
        ),
        compiler_params=pltpu.CompilerParams(
            dimension_semantics=("parallel",)),
    )(x, kp["W1a"], kp["b1a"], kp["W2"], kp["b2"])


# --------------------------------------------------------------------------------------
# Eval-mode BatchNorm folding + weight stacking (plain JAX, done once outside kernel).
# --------------------------------------------------------------------------------------
def build_kernel_params(params):
    def fold(w, b, bn):
        gamma, beta, mean, var = bn
        s = gamma / jnp.sqrt(var + BN_EPS)
        return w * s[:, None, None], (b - mean) * s + beta

    w1f, b1f = fold(params["w1"], params["b1"], params["bn1"])      # (C/2, C, 1), (C/2,)
    w2f, b2f = fold(params["w2"], params["b2"], params["bn2"])      # (C, C/2, K), (C,)
    C = params["wa"].shape[0]
    C_half = w1f.shape[0]
    K = w2f.shape[-1]

    # Fuse the two 1x1 convs into one (C/2 + C, C) matmul weight.
    W1a = jnp.concatenate([w1f[:, :, 0], params["wa"][:, :, 0]], axis=0)
    b1a = jnp.concatenate([b1f, params["ba"]], axis=0).reshape(-1, 1)

    # Stack conv2 taps: W2s[c, t*C_half + i] = w2f[c, i, t]  -> one matmul in-kernel.
    W2s = jnp.transpose(w2f, (0, 2, 1)).reshape(C, K * C_half)
    return {"W1a": W1a, "b1a": b1a, "W2": W2s, "b2": b2f.reshape(-1, 1)}


# --------------------------------------------------------------------------------------
# Plain-JAX reference (explicit conv + BN, eval mode) for correctness check only.
# --------------------------------------------------------------------------------------
def resblock_reference(params, x):
    hp = jax.lax.Precision.HIGHEST

    def conv1d(inp, w, b, pad):
        out = jax.lax.conv_general_dilated(
            inp, w, window_strides=(1,), padding=[(pad, pad)],
            dimension_numbers=("NCH", "OIH", "NCH"), precision=hp)
        return out + b[None, :, None]

    def bn(inp, gamma, beta, mean, var):
        return ((inp - mean[None, :, None])
                / jnp.sqrt(var[None, :, None] + BN_EPS)
                * gamma[None, :, None] + beta[None, :, None])

    K = params["w2"].shape[-1]
    pad = (K - 1) // 2
    h = jax.nn.relu(bn(conv1d(x, params["w1"], params["b1"], 0), *params["bn1"]))
    conv_out = jax.nn.relu(bn(conv1d(h, params["w2"], params["b2"], pad), *params["bn2"]))
    att = jax.nn.sigmoid(conv1d(x, params["wa"], params["ba"], 0))
    return x * att + conv_out                                       # drop_path == identity


# --------------------------------------------------------------------------------------
# Deterministic synthetic parameter init (no checkpoint load).
# --------------------------------------------------------------------------------------
def init_params(key, in_channel, kernel_size=3):
    C = in_channel
    C_half = C // 2
    ks = jax.random.split(key, 8)

    def w(k, shape, fan_in):
        return jax.random.normal(k, shape, jnp.float32) / jnp.sqrt(float(fan_in))

    def bn_params(k, n):
        k1, k2, k3, k4 = jax.random.split(k, 4)
        gamma = jax.random.uniform(k1, (n,), jnp.float32, 0.5, 1.5)
        beta = jax.random.normal(k2, (n,), jnp.float32) * 0.1
        mean = jax.random.normal(k3, (n,), jnp.float32) * 0.1
        var = jax.random.uniform(k4, (n,), jnp.float32, 0.5, 1.5)
        return (gamma, beta, mean, var)

    return {
        "w1": w(ks[0], (C_half, C, 1), C),
        "b1": w(ks[1], (C_half,), C),
        "bn1": bn_params(ks[2], C_half),
        "w2": w(ks[3], (C, C_half, kernel_size), C_half * kernel_size),
        "b2": w(ks[4], (C,), C_half * kernel_size),
        "bn2": bn_params(ks[5], C),
        "wa": w(ks[6], (C, C, 1), C),
        "ba": w(ks[7], (C,), C),
    }


if __name__ == "__main__":
    # Small, module-consistent shapes (original defaults: in_dim=1024, kernel_size=3).
    B, in_channel, in_dim = 2, 64, 256

    key = jax.random.PRNGKey(0)
    kparams_key, kx = jax.random.split(key)
    params = init_params(kparams_key, in_channel, kernel_size=3)
    x = jax.random.normal(kx, (B, in_channel, in_dim), jnp.float32)

    kernel_params = build_kernel_params(params)
    out = jax.block_until_ready(resblock_forward(kernel_params, x))
    assert out.shape == x.shape and out.dtype == x.dtype

    ref = resblock_reference(params, x)
    assert bool(jnp.all(jnp.isfinite(out)))
    max_err = float(jnp.max(jnp.abs(out - ref)))
    assert bool(jnp.allclose(out, ref, rtol=2e-2, atol=2e-2)), max_err

    print("KERNEL_OK")
</pallas_src>

<mosaic_0001>
module attributes {stable_mosaic.version = 11 : i64} {
  func.func @_resblock_kernel(%arg0: i32, %arg1: memref<1x64x256xf32, #tpu.memory_space<vmem>>, %arg2: memref<96x64xf32, #tpu.memory_space<vmem>>, %arg3: memref<96x1xf32, #tpu.memory_space<vmem>>, %arg4: memref<64x96xf32, #tpu.memory_space<vmem>>, %arg5: memref<64x1xf32, #tpu.memory_space<vmem>>, %arg6: memref<1x64x256xf32, #tpu.memory_space<vmem>>) attributes {dimension_semantics = [#tpu.dimension_semantics<parallel>], iteration_bounds = array<i64: 2>, scalar_prefetch = 0 : i64, scratch_operands = 0 : i64, tpu.core_type = #tpu.core_type<tc>, window_params = [{transform_indices = @transform_0, window_bounds = array<i64: 1, 64, 256>}, {pipeline_mode = #tpu.pipeline_mode<synchronous>, transform_indices = @transform_1, window_bounds = array<i64: 96, 64>}, {pipeline_mode = #tpu.pipeline_mode<synchronous>, transform_indices = @transform_2, window_bounds = array<i64: 96, 1>}, {pipeline_mode = #tpu.pipeline_mode<synchronous>, transform_indices = @transform_3, window_bounds = array<i64: 64, 96>}, {pipeline_mode = #tpu.pipeline_mode<synchronous>, transform_indices = @transform_4, window_bounds = array<i64: 64, 1>}, {transform_indices = @transform_5, window_bounds = array<i64: 1, 64, 256>}]} {
    %c0 = arith.constant 0 : index
    %c0_0 = arith.constant 0 : index
    %c0_1 = arith.constant 0 : index
    %0 = vector.load %arg1[%c0, %c0_0, %c0_1] : memref<1x64x256xf32, #tpu.memory_space<vmem>>, vector<1x64x256xf32>
    %1 = vector.shape_cast %0 : vector<1x64x256xf32> to vector<64x256xf32>
    %c0_2 = arith.constant 0 : index
    %c0_3 = arith.constant 0 : index
    %2 = vector.load %arg2[%c0_2, %c0_3] : memref<96x64xf32, #tpu.memory_space<vmem>>, vector<96x64xf32>
    %cst = arith.constant dense<0.000000e+00> : vector<96x256xf32>
    %3 = tpu.matmul %2, %1, %cst {dimension_numbers = #tpu.dot_dimension_numbers<[1], [0], [0], [1], [0, 0, 1, 1], [], []>} : vector<96x64xf32>, vector<64x256xf32>, vector<96x256xf32> -> vector<96x256xf32>
    %c0_4 = arith.constant 0 : index
    %c0_5 = arith.constant 0 : index
    %4 = vector.load %arg3[%c0_4, %c0_5] : memref<96x1xf32, #tpu.memory_space<vmem>>, vector<96x1xf32>
    %5 = vector.broadcast %4 : vector<96x1xf32> to vector<96x256xf32>
    %6 = arith.addf %3, %5 : vector<96x256xf32>
    %7 = vector.extract_strided_slice %6 {offsets = [0, 0], sizes = [32, 256], strides = [1, 1]} : vector<96x256xf32> to vector<32x256xf32>
    %cst_6 = arith.constant 0.000000e+00 : f32
    %8 = vector.broadcast %cst_6 : f32 to vector<32x256xf32>
    %9 = arith.maximumf %7, %8 : vector<32x256xf32>
    %10 = vector.extract_strided_slice %6 {offsets = [32, 0], sizes = [64, 256], strides = [1, 1]} : vector<96x256xf32> to vector<64x256xf32>
    %11 = arith.negf %10 : vector<64x256xf32>
    %12 = math.exp %11 : vector<64x256xf32>
    %cst_7 = arith.constant 1.000000e+00 : f32
    %13 = vector.broadcast %cst_7 : f32 to vector<64x256xf32>
    %14 = arith.addf %13, %12 : vector<64x256xf32>
    %15 = arith.divf %13, %14 : vector<64x256xf32>
    %16 = tpu.iota {dimensions = array<i32: 1>} : vector<32x256xi32>
    %c1_i32 = arith.constant 1 : i32
    %17 = tpu.dynamic_rotate %9 by %c1_i32 dim 1 : vector<32x256xf32>, i32 -> vector<32x256xf32>
    %c1_i32_8 = arith.constant 1 : i32
    %18 = vector.broadcast %c1_i32_8 : i32 to vector<32x256xi32>
    %19 = arith.cmpi slt, %16, %18 : vector<32x256xi32>
    %cst_9 = arith.constant 0.000000e+00 : f32
    %20 = vector.broadcast %cst_9 : f32 to vector<32x256xf32>
    %21 = arith.select %19, %20, %17 : vector<32x256xi1>, vector<32x256xf32>
    %c255_i32 = arith.constant 255 : i32
    %22 = tpu.dynamic_rotate %9 by %c255_i32 dim 1 : vector<32x256xf32>, i32 -> vector<32x256xf32>
    %c255_i32_10 = arith.constant 255 : i32
    %23 = vector.broadcast %c255_i32_10 : i32 to vector<32x256xi32>
    %24 = arith.cmpi sge, %16, %23 : vector<32x256xi32>
    %cst_11 = arith.constant 0.000000e+00 : f32
    %25 = vector.broadcast %cst_11 : f32 to vector<32x256xf32>
    %26 = arith.select %24, %25, %22 : vector<32x256xi1>, vector<32x256xf32>
    %27 = tpu.concatenate %21, %9, %26 in 0 : vector<32x256xf32>, vector<32x256xf32>, vector<32x256xf32> -> vector<96x256xf32>
    %c0_12 = arith.constant 0 : index
    %c0_13 = arith.constant 0 : index
    %28 = vector.load %arg4[%c0_12, %c0_13] : memref<64x96xf32, #tpu.memory_space<vmem>>, vector<64x96xf32>
    %cst_14 = arith.constant dense<0.000000e+00> : vector<64x256xf32>
    %29 = tpu.matmul %28, %27, %cst_14 {dimension_numbers = #tpu.dot_dimension_numbers<[1], [0], [0], [1], [0, 0, 1, 1], [], []>} : vector<64x96xf32>, vector<96x256xf32>, vector<64x256xf32> -> vector<64x256xf32>
    %c0_15 = arith.constant 0 : index
    %c0_16 = arith.constant 0 : index
    %30 = vector.load %arg5[%c0_15, %c0_16] : memref<64x1xf32, #tpu.memory_space<vmem>>, vector<64x1xf32>
    %31 = vector.broadcast %30 : vector<64x1xf32> to vector<64x256xf32>
    %32 = arith.addf %29, %31 : vector<64x256xf32>
    %cst_17 = arith.constant 0.000000e+00 : f32
    %33 = vector.broadcast %cst_17 : f32 to vector<64x256xf32>
    %34 = arith.maximumf %32, %33 : vector<64x256xf32>
    %35 = arith.mulf %1, %15 : vector<64x256xf32>
    %36 = arith.addf %35, %34 : vector<64x256xf32>
    %c0_18 = arith.constant 0 : index
    %c0_19 = arith.constant 0 : index
    %c0_20 = arith.constant 0 : index
    %37 = vector.load %arg6[%c0_18, %c0_19, %c0_20] : memref<1x64x256xf32, #tpu.memory_space<vmem>>, vector<1x64x256xf32>
    %38 = vector.shape_cast %37 : vector<1x64x256xf32> to vector<64x256xf32>
    %39 = vector.shape_cast %36 : vector<64x256xf32> to vector<1x64x256xf32>
    tpu.vector_store %arg6[%c0_18, %c0_19, %c0_20], %39 {strides = array<i32>} : memref<1x64x256xf32, #tpu.memory_space<vmem>>, vector<1x64x256xf32>,
    return
  }
  func.func @transform_0(%arg0: i32) -> (i32, i32, i32) {
    %c0_i32 = arith.constant 0 : i32
    %c0_i32_0 = arith.constant 0 : i32
    %c0_i32_1 = arith.constant 0 : i32
    return %arg0, %c0_i32, %c0_i32_0 : i32, i32, i32
  }
  func.func @transform_1(%arg0: i32) -> (i32, i32) {
    %c0_i32 = arith.constant 0 : i32
    %c0_i32_0 = arith.constant 0 : i32
    %c0_i32_1 = arith.constant 0 : i32
    return %c0_i32, %c0_i32_0 : i32, i32
  }
  func.func @transform_2(%arg0: i32) -> (i32, i32) {
    %c0_i32 = arith.constant 0 : i32
    %c0_i32_0 = arith.constant 0 : i32
    %c0_i32_1 = arith.constant 0 : i32
    return %c0_i32, %c0_i32_0 : i32, i32
  }
  func.func @transform_3(%arg0: i32) -> (i32, i32) {
    %c0_i32 = arith.constant 0 : i32
    %c0_i32_0 = arith.constant 0 : i32
    %c0_i32_1 = arith.constant 0 : i32
    return %c0_i32, %c0_i32_0 : i32, i32
  }
  func.func @transform_4(%arg0: i32) -> (i32, i32) {
    %c0_i32 = arith.constant 0 : i32
    %c0_i32_0 = arith.constant 0 : i32
    %c0_i32_1 = arith.constant 0 : i32
    return %c0_i32, %c0_i32_0 : i32, i32
  }
  func.func @transform_5(%arg0: i32) -> (i32, i32, i32) {
    %c0_i32 = arith.constant 0 : i32
    %c0_i32_0 = arith.constant 0 : i32
    %c0_i32_1 = arith.constant 0 : i32
    return %arg0, %c0_i32, %c0_i32_0 : i32, i32, i32
  }
}

</mosaic_0001>

<llo_original>
// kernel: tpu_custom_call.1
$region0: #{tpu_custom_call.1}
  #allocation0 [shape = 'u32[]', space=smem, size = 0x4, offset = 0x4, fixed_abs, tag = 'smem constant byte address 0x4 - core index']
  #allocation1 [shape = 'u32[72,128]{1,0:T(1,128)}', space=vmem, size = 0x9000, scoped, tag = 'internal scratch']
  %s0 = inlined_call_operand.vmem [shape: f32[2,64,256], index: 0, kind: input, shape index: {}]
  %s1 = inlined_call_operand.vmem [shape: f32[96,64], index: 1, kind: input, shape index: {}]
  %s2 = inlined_call_operand.vmem [shape: f32[96,1], index: 2, kind: input, shape index: {}]
  %s3 = inlined_call_operand.hbm [shape: f32[64,96], index: 3, kind: input, shape index: {}]
  %s4 = inlined_call_operand.vmem [shape: f32[64,1], index: 4, kind: input, shape index: {}]
  %s5 = inlined_call_operand.hbm [shape: f32[2,64,256], index: 5, kind: output, shape index: {}]
  %s6 = sld [smem:[#allocation0]]
  $region57: #{tpu_custom_call.1} parent=0
    _
  %s8 = ssub.s32 1, %s6
  %s9 = scalar_select 0, %s8, %s6
  $region1: #{tpu_custom_call.1} parent=0
    #allocation2 [shape = 'u8[32768]{0}', space=vmem, size = 0x8000, scoped, tag = 'input window, operand 3, single buffered']
    #allocation3 [shape = 's32[2]{0}', space=sflag, size = 0x8, scoped, tag = 'scoped memory for tpu_custom_call.1']
    #allocation4 [shape = 's32[2]{0}', space=sflag, size = 0x8, scoped, tag = 'scoped memory for tpu_custom_call.1']
    #allocation5 [shape = 'u8[131072]{0}', space=vmem, size = 0x20000, scoped, tag = 'output window, operand 0']
    %10 = vsyncpa [#allocation3], 0
    %11 = vsyncpa [#allocation4], 0
    %s12 = scalar_lea.sflag [#allocation4], 1
    %13 = vsyncpa %s12, 0
    loop: start=0, step=1, limit=4
    $region2: #{tpu_custom_call.1} parent=1 // loop_pre_header
      _
    $region3: #{tpu_custom_call.1} parent=1 // loop_header
      %s15 = sphi 0, %s19
      %p16 = scmp.ge.s32.totalorder %s15, 4
      %s25 = sphi 0, %s27
      %s28 = sphi 0, %s25
      %s29 = sphi 0, %s28
      %s45 = sphi 0, %s29
      %s49 = sphi 0, %s49
      %s51 = sphi 0, %s49
      %s52 = sphi 0, %s51
      %s66 = sphi 0, %s52
      %s70 = sphi 0, %s70
      %s72 = sphi 0, %s70
      %s73 = sphi 0, %s72
      %s87 = sphi 0, %s73
      %s91 = sphi 0, %s91
      %s93 = sphi 0, %s91
      %s94 = sphi 0, %s93
      %s108 = sphi 0, %s94
      %s112 = sphi 0, %s112
      %s114 = sphi 0, %s112
      %s115 = sphi 0, %s114
      %s129 = sphi 0, %s115
      %s135 = sphi 0, %s137
      %s138 = sphi 0, %s135
      %s139 = sphi 0, %s138
      %s155 = sphi 0, %s139
    $region4: #{tpu_custom_call.1} parent=1 // loop_header_branch
      %18 = sbr.rel (%p16) target = $region8
    $region5: #{tpu_custom_call.1} parent=1 // loop_body
      %s20 = ssub.s32 %s15, 1
      %s21 = ssub.s32 %s15, 2
      %s22 = sadd.s32 %s15, 1
      %s23 = ssub.s32 %s15, %s22
      %p24 = scmp.eq.s32.totalorder %s23, 0
      %s26 = sadd.s32 %s25, 1
      %s27 = scalar_select %p24, %s25, %s26
      %p30 = pneg %p24
      %p31 = scmp.eq.s32.totalorder %s15, 1
      %p32 = por %p30, %p31
      %p33 = scmp.ne.s32.totalorder %s25, %s28
      %p34 = scmp.eq.s32.totalorder %s15, 0
      %p35 = por %p33, %p34
      %p36 = scmp.ne.s32.totalorder %s25, %s28
      %p37 = scmp.eq.s32.totalorder %s20, 1
      %p38 = por %p36, %p37
      %p39 = scmp.ne.s32.totalorder %s28, %s29
      %p40 = scmp.eq.s32.totalorder %s20, 0
      %p41 = por %p39, %p40
      %p42 = scmp.ne.s32.totalorder %s28, %s29
      %p43 = scmp.eq.s32.totalorder %s21, 1
      %p44 = por %p42, %p43
      %p46 = scmp.ne.s32.totalorder %s29, %s45
      %p47 = scmp.eq.s32.totalorder %s21, 0
      %p48 = por %p46, %p47
      %s50 = sadd.s32 %s49, 1
      %p53 = scmp.eq.s32.totalorder %s15, 1
      %p54 = scmp.ne.s32.totalorder %s49, %s51
      %p55 = scmp.eq.s32.totalorder %s15, 0
      %p56 = por %p54, %p55
      %p57 = scmp.ne.s32.totalorder %s49, %s51
      %p58 = scmp.eq.s32.totalorder %s20, 1
      %p59 = por %p57, %p58
      %p60 = scmp.ne.s32.totalorder %s51, %s52
      %p61 = scmp.eq.s32.totalorder %s20, 0
      %p62 = por %p60, %p61
      %p63 = scmp.ne.s32.totalorder %s51, %s52
      %p64 = scmp.eq.s32.totalorder %s21, 1
      %p65 = por %p63, %p64
      %p67 = scmp.ne.s32.totalorder %s52, %s66
      %p68 = scmp.eq.s32.totalorder %s21, 0
      %p69 = por %p67, %p68
      %s71 = sadd.s32 %s70, 1
      %p74 = scmp.eq.s32.totalorder %s15, 1
      %p75 = scmp.ne.s32.totalorder %s70, %s72
      %p76 = scmp.eq.s32.totalorder %s15, 0
      %p77 = por %p75, %p76
      %p78 = scmp.ne.s32.totalorder %s70, %s72
      %p79 = scmp.eq.s32.totalorder %s20, 1
      %p80 = por %p78, %p79
      %p81 = scmp.ne.s32.totalorder %s72, %s73
      %p82 = scmp.eq.s32.totalorder %s20, 0
      %p83 = por %p81, %p82
      %p84 = scmp.ne.s32.totalorder %s72, %s73
      %p85 = scmp.eq.s32.totalorder %s21, 1
      %p86 = por %p84, %p85
      %p88 = scmp.ne.s32.totalorder %s73, %s87
      %p89 = scmp.eq.s32.totalorder %s21, 0
      %p90 = por %p88, %p89
      %s92 = sadd.s32 %s91, 1
      %p95 = scmp.eq.s32.totalorder %s15, 1
      %p96 = scmp.ne.s32.totalorder %s91, %s93
      %p97 = scmp.eq.s32.totalorder %s15, 0
      %p98 = por %p96, %p97
      %p99 = scmp.ne.s32.totalorder %s91, %s93
      %p100 = scmp.eq.s32.totalorder %s20, 1
      %p101 = por %p99, %p100
      %p102 = scmp.ne.s32.totalorder %s93, %s94
      %p103 = scmp.eq.s32.totalorder %s20, 0
      %p104 = por %p102, %p103
      %p105 = scmp.ne.s32.totalorder %s93, %s94
      %p106 = scmp.eq.s32.totalorder %s21, 1
      %p107 = por %p105, %p106
      %p109 = scmp.ne.s32.totalorder %s94, %s108
      %p110 = scmp.eq.s32.totalorder %s21, 0
      %p111 = por %p109, %p110
      %s113 = sadd.s32 %s112, 1
      %p116 = scmp.eq.s32.totalorder %s15, 1
      %p117 = scmp.ne.s32.totalorder %s112, %s114
      %p118 = scmp.eq.s32.totalorder %s15, 0
      %p119 = por %p117, %p118
      %p120 = scmp.ne.s32.totalorder %s112, %s114
      %p121 = scmp.eq.s32.totalorder %s20, 1
      %p122 = por %p120, %p121
      %p123 = scmp.ne.s32.totalorder %s114, %s115
      %p124 = scmp.eq.s32.totalorder %s20, 0
      %p125 = por %p123, %p124
      %p126 = scmp.ne.s32.totalorder %s114, %s115
      %p127 = scmp.eq.s32.totalorder %s21, 1
      %p128 = por %p126, %p127
      %p130 = scmp.ne.s32.totalorder %s115, %s129
      %p131 = scmp.eq.s32.totalorder %s21, 0
      %p132 = por %p130, %p131
      %s133 = ssub.s32 %s15, %s22
      %p134 = scmp.eq.s32.totalorder %s133, 0
      %s136 = sadd.s32 %s135, 1
      %s137 = scalar_select %p134, %s135, %s136
      %p140 = pneg %p134
      %p141 = scmp.eq.s32.totalorder %s15, 1
      %p142 = por %p140, %p141
      %p143 = scmp.ne.s32.totalorder %s135, %s138
      %p144 = scmp.eq.s32.totalorder %s15, 0
      %p145 = por %p143, %p144
      %p146 = scmp.ne.s32.totalorder %s135, %s138
      %p147 = scmp.eq.s32.totalorder %s20, 1
      %p148 = por %p146, %p147
      %p149 = scmp.ne.s32.totalorder %s138, %s139
      %p150 = scmp.eq.s32.totalorder %s20, 0
      %p151 = por %p149, %p150
      %p152 = scmp.ne.s32.totalorder %s138, %s139
      %p153 = scmp.eq.s32.totalorder %s21, 1
      %p154 = por %p152, %p153
      %p156 = scmp.ne.s32.totalorder %s139, %s155
      %p157 = scmp.eq.s32.totalorder %s21, 0
      %p158 = por %p156, %p157
      %p159 = scmp.le.s32.totalorder 1, %s15
      %p160 = scmp.lt.s32.totalorder %s15, 3
      %p161 = pnand %p159, %p160
      %p162 = pneg %p161
      // Predicated region
      $region9: #{tpu_custom_call.1} parent=5 // pred_check
        _
      $region10: #{tpu_custom_call.1} parent=5 // pred_check_branch
        %164 = sbr.rel (%p161) target = $region12
      $region11: #{tpu_custom_call.1} parent=5 // pred_region
        %s165 = ssub.s32 %s15, 1
        // Predicated region
        $region13: #{tpu_custom_call.1} parent=11 // pred_check
          %p166 = pneg %p62
        $region14: #{tpu_custom_call.1} parent=11 // pred_check_branch
          %168 = sbr.rel (%p166) target = $region16
        $region15: #{tpu_custom_call.1} parent=11 // pred_region
          _
        $region16: #{tpu_custom_call.1} parent=11 // pred_fallthru
          _
        // Predicated region
        $region17: #{tpu_custom_call.1} parent=11 // pred_check
          %p169 = pneg %p83
        $region18: #{tpu_custom_call.1} parent=11 // pred_check_branch
          %171 = sbr.rel (%p169) target = $region20
        $region19: #{tpu_custom_call.1} parent=11 // pred_region
          _
        $region20: #{tpu_custom_call.1} parent=11 // pred_fallthru
          _
        // Predicated region
        $region21: #{tpu_custom_call.1} parent=11 // pred_check
          %p172 = pneg %p104
        $region22: #{tpu_custom_call.1} parent=11 // pred_check_branch
          %174 = sbr.rel (%p172) target = $region24
        $region23: #{tpu_custom_call.1} parent=11 // pred_region
          %176 = vsyncadd [#allocation3], 0
          %s177 = sshll.u32 %s3, 4
          %s178 = int_to_ptr.hbm [resolvable:$true] %s177
          %s179 = sshll.u32 [#allocation2], 4
          %s180 = int_to_ptr.vmem [resolvable:$true] %s179
          %185 = dma.hbm_to_vmem [thread:$0]  %s178, 1024, %s180, [#allocation3], 128, 128, 8
        $region24: #{tpu_custom_call.1} parent=11 // pred_fallthru
          _
        // Predicated region
        $region25: #{tpu_custom_call.1} parent=11 // pred_check
          %p186 = pneg %p125
        $region26: #{tpu_custom_call.1} parent=11 // pred_check_branch
          %188 = sbr.rel (%p186) target = $region28
        $region27: #{tpu_custom_call.1} parent=11 // pred_region
          _
        $region28: #{tpu_custom_call.1} parent=11 // pred_fallthru
          _
      $region12: #{tpu_custom_call.1} parent=5 // pred_fallthru
        _
      %p189 = scmp.lt.s32.totalorder %s15, 2
      // Predicated region
      $region29: #{tpu_custom_call.1} parent=5 // pred_check
        %p190 = pneg %p189
      $region30: #{tpu_custom_call.1} parent=5 // pred_check_branch
        %192 = sbr.rel (%p190) target = $region32
      $region31: #{tpu_custom_call.1} parent=5 // pred_region
        // Predicated region
        $region33: #{tpu_custom_call.1} parent=31 // pred_check
          %p193 = pneg %p35
        $region34: #{tpu_custom_call.1} parent=31 // pred_check_branch
          %195 = sbr.rel (%p193) target = $region36
        $region35: #{tpu_custom_call.1} parent=31 // pred_region
          %p196 = scmp.lt.s32.totalorder %s15, 1
          %s197 = scalar_select %p196, %s15, 1
          %s198 = smul.addr %s197, 16
          %s199 = smul.addr %s198, 8
          %s200 = scalar_lea.vmem %s0, %s199
        $region36: #{tpu_custom_call.1} parent=31 // pred_fallthru
          _
      $region32: #{tpu_custom_call.1} parent=5 // pred_fallthru
        _
      %p201 = scmp.le.s32.totalorder 1, %s15
      %p202 = scmp.lt.s32.totalorder %s15, 3
      %p203 = pnand %p201, %p202
      %p204 = pneg %p203
      // Predicated region
      $region37: #{tpu_custom_call.1} parent=5 // pred_check
        _
      $region38: #{tpu_custom_call.1} parent=5 // pred_check_branch
        %206 = sbr.rel (%p203) target = $region40
      $region39: #{tpu_custom_call.1} parent=5 // pred_region
        %s207 = ssub.s32 %s15, 1
        // Predicated region
        $region41: #{tpu_custom_call.1} parent=39 // pred_check
          %p208 = pneg %p104
        $region42: #{tpu_custom_call.1} parent=39 // pred_check_branch
          %210 = sbr.rel (%p208) target = $region44
        $region43: #{tpu_custom_call.1} parent=39 // pred_region
          %212 = dma.done [#allocation3], 1024
        $region44: #{tpu_custom_call.1} parent=39 // pred_fallthru
          _
        %p213 = scmp.lt.s32.totalorder %s20, 1
        %s214 = scalar_select %p213, %s20, 1
        %s215 = smul.addr %s214, 16
        %s216 = smul.addr %s215, 8
        %s217 = scalar_lea.vmem %s0, %s216
        %p218 = pneg %p41
        %p219 = pneg %p38
        %p220 = pneg %p62
        %p221 = pneg %p59
        %p222 = pneg %p83
        %p223 = pneg %p80
        %p224 = pneg %p104
        %p225 = pneg %p101
        %p226 = pneg %p125
        %p227 = pneg %p122
        %p228 = pneg %p151
        %p229 = pneg %p148
        %s230 = sand.u32 %s138, 1
        %s231 = scalar_lea.sflag [#allocation4], %s230
        %s232 = sand.u32 %s138, 1
        %s233 = smul.addr %s232, 128
        %s234 = scalar_lea.vmem [#allocation5], %s233
        %p235 = scmp.lt.s32.totalorder %s20, 1
        %s236 = scalar_select %p235, %s20, 1
        %s237 = smul.addr %s236, 16
        %s238 = smul.addr %s237, 8
        %s239 = scalar_lea.vmem %s0, %s238
        %v240 = vld [vmem:[%s239] sm:$0xff]
        %v241 = vld [vmem:[%s239 + $0x8] sm:$0xff]
        %v242 = vld [vmem:[%s239 + $0x10] sm:$0xff]
        %v243 = vld [vmem:[%s239 + $0x18] sm:$0xff]
        %v244 = vld [vmem:[%s239 + $0x20] sm:$0xff]
        %v245 = vld [vmem:[%s239 + $0x28] sm:$0xff]
        %v246 = vld [vmem:[%s239 + $0x30] sm:$0xff]
        %v247 = vld [vmem:[%s239 + $0x38] sm:$0xff]
        %v248 = vld [vmem:[%s239 + $0x40] sm:$0xff]
        %v249 = vld [vmem:[%s239 + $0x48] sm:$0xff]
        %v250 = vld [vmem:[%s239 + $0x50] sm:$0xff]
        %v251 = vld [vmem:[%s239 + $0x58] sm:$0xff]
        %v252 = vld [vmem:[%s239 + $0x60] sm:$0xff]
        %v253 = vld [vmem:[%s239 + $0x68] sm:$0xff]
        %v254 = vld [vmem:[%s239 + $0x70] sm:$0xff]
        %v255 = vld [vmem:[%s239 + $0x78] sm:$0xff]
        %v256 = vld [vmem:[%s1] sm:$0xff]
        %v257 = vld [vmem:[%s1 + $0x8] sm:$0xff]
        %v258 = vld [vmem:[%s1 + $0x10] sm:$0xff]
        %v259 = vld [vmem:[%s1 + $0x18] sm:$0xff]
        %v260 = vld [vmem:[%s1 + $0x20] sm:$0xff]
        %v261 = vld [vmem:[%s1 + $0x28] sm:$0xff]
        %v262 = vld [vmem:[%s1 + $0x30] sm:$0xff]
        %v263 = vld [vmem:[%s1 + $0x38] sm:$0xff]
        %v264 = vld [vmem:[%s1 + $0x40] sm:$0xff]
        %v265 = vld [vmem:[%s1 + $0x48] sm:$0xff]
        %v266 = vld [vmem:[%s1 + $0x50] sm:$0xff]
        %v267 = vld [vmem:[%s1 + $0x58] sm:$0xff]
        %v268 = vld [vmem:[%s2] sm:$0xff]
        %v269 = vld [vmem:[%s2 + $0x8] sm:$0xff]
        %v270 = vld [vmem:[%s2 + $0x10] sm:$0xff]
        %v271 = vld [vmem:[%s2 + $0x18] sm:$0xff]
        %v272 = vld [vmem:[%s2 + $0x20] sm:$0xff]
        %v273 = vld [vmem:[%s2 + $0x28] sm:$0xff]
        %v274 = vld [vmem:[%s2 + $0x30] sm:$0xff]
        %v275 = vld [vmem:[%s2 + $0x38] sm:$0xff]
        %v276 = vld [vmem:[%s2 + $0x40] sm:$0xff]
        %v277 = vld [vmem:[%s2 + $0x48] sm:$0xff]
        %v278 = vld [vmem:[%s2 + $0x50] sm:$0xff]
        %v279 = vld [vmem:[%s2 + $0x58] sm:$0xff]
        %281 = vset.pattern.permute.xlu0 0
        %282 = vperm.xlu0 %281, %v268
        %v283 = vpop.permute.xlu0 %282
        %286 = vset.pattern.permute.xlu0 0
        %287 = vperm.xlu0 %286, %v269
        %v288 = vpop.permute.xlu0 %287
        %291 = vset.pattern.permute.xlu0 0
        %292 = vperm.xlu0 %291, %v270
        %v293 = vpop.permute.xlu0 %292
        %296 = vset.pattern.permute.xlu0 0
        %297 = vperm.xlu0 %296, %v271
        %v298 = vpop.permute.xlu0 %297
        %301 = vset.pattern.permute.xlu0 0
        %302 = vperm.xlu0 %301, %v272
        %v303 = vpop.permute.xlu0 %302
        %306 = vset.pattern.permute.xlu0 0
        %307 = vperm.xlu0 %306, %v273
        %v308 = vpop.permute.xlu0 %307
        %311 = vset.pattern.permute.xlu0 0
        %312 = vperm.xlu0 %311, %v274
        %v313 = vpop.permute.xlu0 %312
        %316 = vset.pattern.permute.xlu0 0
        %317 = vperm.xlu0 %316, %v275
        %v318 = vpop.permute.xlu0 %317
        %321 = vset.pattern.permute.xlu0 0
        %322 = vperm.xlu0 %321, %v276
        %v323 = vpop.permute.xlu0 %322
        %326 = vset.pattern.permute.xlu0 0
        %327 = vperm.xlu0 %326, %v277
        %v328 = vpop.permute.xlu0 %327
        %331 = vset.pattern.permute.xlu0 0
        %332 = vperm.xlu0 %331, %v278
        %v333 = vpop.permute.xlu0 %332
        %336 = vset.pattern.permute.xlu0 0
        %337 = vperm.xlu0 %336, %v279
        %v338 = vpop.permute.xlu0 %337
        %vm340 = vcmask 523264
        %v342 = vsel %vm340, %v256, 0
        %v345 = vsel %vm340, %v257, 0
        %v348 = vsel %vm340, %v258, 0
        %v351 = vsel %vm340, %v259, 0
        %v354 = vsel %vm340, %v260, 0
        %v357 = vsel %vm340, %v261, 0
        %v360 = vsel %vm340, %v262, 0
        %v363 = vsel %vm340, %v263, 0
        %v366 = vsel %vm340, %v264, 0
        %v369 = vsel %vm340, %v265, 0
        %v372 = vsel %vm340, %v266, 0
        %v375 = vsel %vm340, %v267, 0
        %377 = vmatpush.msra.mxu0 0.0
        %378 = vmatpush.msra.mxu0 0.0
        %379 = vmatpush.msra.mxu0 0.0
        %380 = vmatpush.msra.mxu0 0.0
        %381 = vmatpush.msra.mxu0 0.0
        %382 = vmatpush.msra.mxu0 0.0
        %383 = vmatpush.msra.mxu0 0.0
        %384 = vmatpush.msra.mxu0 0.0
        %385 = vmatpush.msra.mxu0 %v254
        %386 = vmatpush.msra.mxu0 %v252
        %387 = vmatpush.msra.mxu0 %v250
        %388 = vmatpush.msra.mxu0 %v248
        %389 = vmatpush.msra.mxu0 %v246
        %390 = vmatpush.msra.mxu0 %v244
        %391 = vmatpush.msra.mxu0 %v242
        %392 = vmatpush.msra.mxu0 %v240
        %393 = vmatmul.f32.gmra.mxu0 %v342
        %v394 = vpop.f32.mrf.mxu0
        %v395 = vadd.f32 %v283, %v394
        %396 = vmatmul.f32.gmra.mxu0 %v345
        %v397 = vpop.f32.mrf.mxu0
        %v398 = vadd.f32 %v288, %v397
        %399 = vmatmul.f32.gmra.mxu0 %v348
        %v400 = vpop.f32.mrf.mxu0
        %v401 = vadd.f32 %v293, %v400
        %402 = vmatmul.f32.gmra.mxu0 %v351
        %v403 = vpop.f32.mrf.mxu0
        %v404 = vadd.f32 %v298, %v403
        %405 = vmatmul.f32.gmra.mxu0 %v354
        %v406 = vpop.f32.mrf.mxu0
        %v407 = vadd.f32 %v303, %v406
        %408 = vmatmul.f32.gmra.mxu0 %v357
        %v409 = vpop.f32.mrf.mxu0
        %v410 = vadd.f32 %v308, %v409
        %411 = vmatmul.f32.gmra.mxu0 %v360
        %v412 = vpop.f32.mrf.mxu0
        %v413 = vadd.f32 %v313, %v412
        %414 = vmatmul.f32.gmra.mxu0 %v363
        %v415 = vpop.f32.mrf.mxu0
        %v416 = vadd.f32 %v318, %v415
        %417 = vmatmul.f32.gmra.mxu0 %v366
        %v418 = vpop.f32.mrf.mxu0
        %v419 = vadd.f32 %v323, %v418
        %420 = vmatmul.f32.gmra.mxu0 %v369
        %v421 = vpop.f32.mrf.mxu0
        %v422 = vadd.f32 %v328, %v421
        %423 = vmatmul.f32.gmra.mxu0 %v372
        %v424 = vpop.f32.mrf.mxu0
        %v425 = vadd.f32 %v333, %v424
        %426 = vmatmul.f32.gmra.mxu0 %v375
        %v427 = vpop.f32.mrf.mxu0
        %v428 = vadd.f32 %v338, %v427
        %429 = vdwg.mxu0
        %430 = vmatpush.msra.mxu0 0.0
        %431 = vmatpush.msra.mxu0 0.0
        %432 = vmatpush.msra.mxu0 0.0
        %433 = vmatpush.msra.mxu0 0.0
        %434 = vmatpush.msra.mxu0 0.0
        %435 = vmatpush.msra.mxu0 0.0
        %436 = vmatpush.msra.mxu0 0.0
        %437 = vmatpush.msra.mxu0 0.0
        %438 = vmatpush.msra.mxu0 %v255
        %439 = vmatpush.msra.mxu0 %v253
        %440 = vmatpush.msra.mxu0 %v251
        %441 = vmatpush.msra.mxu0 %v249
        %442 = vmatpush.msra.mxu0 %v247
        %443 = vmatpush.msra.mxu0 %v245
        %444 = vmatpush.msra.mxu0 %v243
        %445 = vmatpush.msra.mxu0 %v241
        %446 = vmatmul.f32.gmra.mxu0 %v342
        %v447 = vpop.f32.mrf.mxu0
        %v448 = vadd.f32 %v283, %v447
        %449 = vmatmul.f32.gmra.mxu0 %v345
        %v450 = vpop.f32.mrf.mxu0
        %v451 = vadd.f32 %v288, %v450
        %452 = vmatmul.f32.gmra.mxu0 %v348
        %v453 = vpop.f32.mrf.mxu0
        %v454 = vadd.f32 %v293, %v453
        %455 = vmatmul.f32.gmra.mxu0 %v351
        %v456 = vpop.f32.mrf.mxu0
        %v457 = vadd.f32 %v298, %v456
        %458 = vmatmul.f32.gmra.mxu0 %v354
        %v459 = vpop.f32.mrf.mxu0
        %v460 = vadd.f32 %v303, %v459
        %461 = vmatmul.f32.gmra.mxu0 %v357
        %v462 = vpop.f32.mrf.mxu0
        %v463 = vadd.f32 %v308, %v462
        %464 = vmatmul.f32.gmra.mxu0 %v360
        %v465 = vpop.f32.mrf.mxu0
        %v466 = vadd.f32 %v313, %v465
        %467 = vmatmul.f32.gmra.mxu0 %v363
        %v468 = vpop.f32.mrf.mxu0
        %v469 = vadd.f32 %v318, %v468
        %470 = vmatmul.f32.gmra.mxu0 %v366
        %v471 = vpop.f32.mrf.mxu0
        %v472 = vadd.f32 %v323, %v471
        %473 = vmatmul.f32.gmra.mxu0 %v369
        %v474 = vpop.f32.mrf.mxu0
        %v475 = vadd.f32 %v328, %v474
        %476 = vmatmul.f32.gmra.mxu0 %v372
        %v477 = vpop.f32.mrf.mxu0
        %v478 = vadd.f32 %v333, %v477
        %479 = vmatmul.f32.gmra.mxu0 %v375
        %v480 = vpop.f32.mrf.mxu0
        %v481 = vadd.f32 %v338, %v480
        %482 = vdwg.mxu0
        %v483 = vmax.f32 %v395, 0.0
        %v484 = vmax.f32 %v448, 0.0
        %v485 = vmax.f32 %v398, 0.0
        %v486 = vmax.f32 %v451, 0.0
        %v487 = vmax.f32 %v401, 0.0
        %v488 = vmax.f32 %v454, 0.0
        %v489 = vmax.f32 %v404, 0.0
        %v490 = vmax.f32 %v457, 0.0
        %v491 = vxor.u32 %v407, 2147483648
        %v492 = vxor.u32 %v460, 2147483648
        %v493 = vxor.u32 %v410, 2147483648
        %v494 = vxor.u32 %v463, 2147483648
        %v495 = vxor.u32 %v413, 2147483648
        %v496 = vxor.u32 %v466, 2147483648
        %v497 = vxor.u32 %v416, 2147483648
        %v498 = vxor.u32 %v469, 2147483648
        %v499 = vxor.u32 %v419, 2147483648
        %v500 = vxor.u32 %v472, 2147483648
        %v501 = vxor.u32 %v422, 2147483648
        %v502 = vxor.u32 %v475, 2147483648
        %v503 = vxor.u32 %v425, 2147483648
        %v504 = vxor.u32 %v478, 2147483648
        %v505 = vxor.u32 %v428, 2147483648
        %v506 = vxor.u32 %v481, 2147483648
        %v507 = vmul.f32 %v491, 1.442695
        %v508 = vpow.pop %v507
        %v509 = vmul.f32 %v492, 1.442695
        %v510 = vpow.pop %v509
        %v511 = vmul.f32 %v493, 1.442695
        %v512 = vpow.pop %v511
        %v513 = vmul.f32 %v494, 1.442695
        %v514 = vpow.pop %v513
        %v515 = vmul.f32 %v495, 1.442695
        %v516 = vpow.pop %v515
        %v517 = vmul.f32 %v496, 1.442695
        %v518 = vpow.pop %v517
        %v519 = vmul.f32 %v497, 1.442695
        %v520 = vpow.pop %v519
        %v521 = vmul.f32 %v498, 1.442695
        %v522 = vpow.pop %v521
        %v523 = vmul.f32 %v499, 1.442695
        %v524 = vpow.pop %v523
        %v525 = vmul.f32 %v500, 1.442695
        %v526 = vpow.pop %v525
        %v527 = vmul.f32 %v501, 1.442695
        %v528 = vpow.pop %v527
        %v529 = vmul.f32 %v502, 1.442695
        %v530 = vpow.pop %v529
        %v531 = vmul.f32 %v503, 1.442695
        %v532 = vpow.pop %v531
        %v533 = vmul.f32 %v504, 1.442695
        %v534 = vpow.pop %v533
        %v535 = vmul.f32 %v505, 1.442695
        %v536 = vpow.pop %v535
        %v537 = vmul.f32 %v506, 1.442695
        %v538 = vpow.pop %v537
        %v539 = vadd.f32 %v508, 1.0
        %v540 = vadd.f32 %v510, 1.0
        %v541 = vadd.f32 %v512, 1.0
        %v542 = vadd.f32 %v514, 1.0
        %v543 = vadd.f32 %v516, 1.0
        %v544 = vadd.f32 %v518, 1.0
        %v545 = vadd.f32 %v520, 1.0
        %v546 = vadd.f32 %v522, 1.0
        %v547 = vadd.f32 %v524, 1.0
        %v548 = vadd.f32 %v526, 1.0
        %v549 = vadd.f32 %v528, 1.0
        %v550 = vadd.f32 %v530, 1.0
        %v551 = vadd.f32 %v532, 1.0
        %v552 = vadd.f32 %v534, 1.0
        %v553 = vadd.f32 %v536, 1.0
        %v554 = vadd.f32 %v538, 1.0
        %v555 = vrcp.pop %v539
        %v556 = vmul.f32 %v539, %v555
        %v557 = vsub.f32 1.0, %v556
        %v558 = vmul.f32 %v555, %v557
        %v559 = vadd.f32 %v555, %v558
        %vm560 = vweird.f32 %v539
        %vm561 = vweird.f32 %v555
        %vm562 = vmor %vm560, %vm561
        %v563 = vsel %vm562, %v555, %v559
        %v564 = vand.u32 2147483647, %v539
        %vm565 = vcmp.eq.f32.partialorder %v564, 8.507059e+37
        %v566 = vand.u32 %v539, 2147483648
        %v567 = vor.u32 1.1754944e-38, %v566
        %v568 = vsel %vm565, %v567, %v563
        %v569 = vmul.f32 1.0, %v568
        %v570 = vrcp.pop %v540
        %v571 = vmul.f32 %v540, %v570
        %v572 = vsub.f32 1.0, %v571
        %v573 = vmul.f32 %v570, %v572
        %v574 = vadd.f32 %v570, %v573
        %vm575 = vweird.f32 %v540
        %vm576 = vweird.f32 %v570
        %vm577 = vmor %vm575, %vm576
        %v578 = vsel %vm577, %v570, %v574
        %v579 = vand.u32 2147483647, %v540
        %vm580 = vcmp.eq.f32.partialorder %v579, 8.507059e+37
        %v581 = vand.u32 %v540, 2147483648
        %v582 = vor.u32 1.1754944e-38, %v581
        %v583 = vsel %vm580, %v582, %v578
        %v584 = vmul.f32 1.0, %v583
        %v585 = vrcp.pop %v541
        %v586 = vmul.f32 %v541, %v585
        %v587 = vsub.f32 1.0, %v586
        %v588 = vmul.f32 %v585, %v587
        %v589 = vadd.f32 %v585, %v588
        %vm590 = vweird.f32 %v541
        %vm591 = vweird.f32 %v585
        %vm592 = vmor %vm590, %vm591
        %v593 = vsel %vm592, %v585, %v589
        %v594 = vand.u32 2147483647, %v541
        %vm595 = vcmp.eq.f32.partialorder %v594, 8.507059e+37
        %v596 = vand.u32 %v541, 2147483648
        %v597 = vor.u32 1.1754944e-38, %v596
        %v598 = vsel %vm595, %v597, %v593
        %v599 = vmul.f32 1.0, %v598
        %v600 = vrcp.pop %v542
        %v601 = vmul.f32 %v542, %v600
        %v602 = vsub.f32 1.0, %v601
        %v603 = vmul.f32 %v600, %v602
        %v604 = vadd.f32 %v600, %v603
        %vm605 = vweird.f32 %v542
        %vm606 = vweird.f32 %v600
        %vm607 = vmor %vm605, %vm606
        %v608 = vsel %vm607, %v600, %v604
        %v609 = vand.u32 2147483647, %v542
        %vm610 = vcmp.eq.f32.partialorder %v609, 8.507059e+37
        %v611 = vand.u32 %v542, 2147483648
        %v612 = vor.u32 1.1754944e-38, %v611
        %v613 = vsel %vm610, %v612, %v608
        %v614 = vmul.f32 1.0, %v613
        %v615 = vrcp.pop %v543
        %v616 = vmul.f32 %v543, %v615
        %v617 = vsub.f32 1.0, %v616
        %v618 = vmul.f32 %v615, %v617
        %v619 = vadd.f32 %v615, %v618
        %vm620 = vweird.f32 %v543
        %vm621 = vweird.f32 %v615
        %vm622 = vmor %vm620, %vm621
        %v623 = vsel %vm622, %v615, %v619
        %v624 = vand.u32 2147483647, %v543
        %vm625 = vcmp.eq.f32.partialorder %v624, 8.507059e+37
        %v626 = vand.u32 %v543, 2147483648
        %v627 = vor.u32 1.1754944e-38, %v626
        %v628 = vsel %vm625, %v627, %v623
        %v629 = vmul.f32 1.0, %v628
        %v630 = vrcp.pop %v544
        %v631 = vmul.f32 %v544, %v630
        %v632 = vsub.f32 1.0, %v631
        %v633 = vmul.f32 %v630, %v632
        %v634 = vadd.f32 %v630, %v633
        %vm635 = vweird.f32 %v544
        %vm636 = vweird.f32 %v630
        %vm637 = vmor %vm635, %vm636
        %v638 = vsel %vm637, %v630, %v634
        %v639 = vand.u32 2147483647, %v544
        %vm640 = vcmp.eq.f32.partialorder %v639, 8.507059e+37
        %v641 = vand.u32 %v544, 2147483648
        %v642 = vor.u32 1.1754944e-38, %v641
        %v643 = vsel %vm640, %v642, %v638
        %v644 = vmul.f32 1.0, %v643
        %v645 = vrcp.pop %v545
        %v646 = vmul.f32 %v545, %v645
        %v647 = vsub.f32 1.0, %v646
        %v648 = vmul.f32 %v645, %v647
        %v649 = vadd.f32 %v645, %v648
        %vm650 = vweird.f32 %v545
        %vm651 = vweird.f32 %v645
        %vm652 = vmor %vm650, %vm651
        %v653 = vsel %vm652, %v645, %v649
        %v654 = vand.u32 2147483647, %v545
        %vm655 = vcmp.eq.f32.partialorder %v654, 8.507059e+37
        %v656 = vand.u32 %v545, 2147483648
        %v657 = vor.u32 1.1754944e-38, %v656
        %v658 = vsel %vm655, %v657, %v653
        %v659 = vmul.f32 1.0, %v658
        %v660 = vrcp.pop %v546
        %v661 = vmul.f32 %v546, %v660
        %v662 = vsub.f32 1.0, %v661
        %v663 = vmul.f32 %v660, %v662
        %v664 = vadd.f32 %v660, %v663
        %vm665 = vweird.f32 %v546
        %vm666 = vweird.f32 %v660
        %vm667 = vmor %vm665, %vm666
        %v668 = vsel %vm667, %v660, %v664
        %v669 = vand.u32 2147483647, %v546
        %vm670 = vcmp.eq.f32.partialorder %v669, 8.507059e+37
        %v671 = vand.u32 %v546, 2147483648
        %v672 = vor.u32 1.1754944e-38, %v671
        %v673 = vsel %vm670, %v672, %v668
        %v674 = vmul.f32 1.0, %v673
        %v675 = vrcp.pop %v547
        %v676 = vmul.f32 %v547, %v675
        %v677 = vsub.f32 1.0, %v676
        %v678 = vmul.f32 %v675, %v677
        %v679 = vadd.f32 %v675, %v678
        %vm680 = vweird.f32 %v547
        %vm681 = vweird.f32 %v675
        %vm682 = vmor %vm680, %vm681
        %v683 = vsel %vm682, %v675, %v679
        %v684 = vand.u32 2147483647, %v547
        %vm685 = vcmp.eq.f32.partialorder %v684, 8.507059e+37
        %v686 = vand.u32 %v547, 2147483648
        %v687 = vor.u32 1.1754944e-38, %v686
        %v688 = vsel %vm685, %v687, %v683
        %v689 = vmul.f32 1.0, %v688
        %v690 = vrcp.pop %v548
        %v691 = vmul.f32 %v548, %v690
        %v692 = vsub.f32 1.0, %v691
        %v693 = vmul.f32 %v690, %v692
        %v694 = vadd.f32 %v690, %v693
        %vm695 = vweird.f32 %v548
        %vm696 = vweird.f32 %v690
        %vm697 = vmor %vm695, %vm696
        %v698 = vsel %vm697, %v690, %v694
        %v699 = vand.u32 2147483647, %v548
        %vm700 = vcmp.eq.f32.partialorder %v699, 8.507059e+37
        %v701 = vand.u32 %v548, 2147483648
        %v702 = vor.u32 1.1754944e-38, %v701
        %v703 = vsel %vm700, %v702, %v698
        %v704 = vmul.f32 1.0, %v703
        %v705 = vrcp.pop %v549
        %v706 = vmul.f32 %v549, %v705
        %v707 = vsub.f32 1.0, %v706
        %v708 = vmul.f32 %v705, %v707
        %v709 = vadd.f32 %v705, %v708
        %vm710 = vweird.f32 %v549
        %vm711 = vweird.f32 %v705
        %vm712 = vmor %vm710, %vm711
        %v713 = vsel %vm712, %v705, %v709
        %v714 = vand.u32 2147483647, %v549
        %vm715 = vcmp.eq.f32.partialorder %v714, 8.507059e+37
        %v716 = vand.u32 %v549, 2147483648
        %v717 = vor.u32 1.1754944e-38, %v716
        %v718 = vsel %vm715, %v717, %v713
        %v719 = vmul.f32 1.0, %v718
        %v720 = vrcp.pop %v550
        %v721 = vmul.f32 %v550, %v720
        %v722 = vsub.f32 1.0, %v721
        %v723 = vmul.f32 %v720, %v722
        %v724 = vadd.f32 %v720, %v723
        %vm725 = vweird.f32 %v550
        %vm726 = vweird.f32 %v720
        %vm727 = vmor %vm725, %vm726
        %v728 = vsel %vm727, %v720, %v724
        %v729 = vand.u32 2147483647, %v550
        %vm730 = vcmp.eq.f32.partialorder %v729, 8.507059e+37
        %v731 = vand.u32 %v550, 2147483648
        %v732 = vor.u32 1.1754944e-38, %v731
        %v733 = vsel %vm730, %v732, %v728
        %v734 = vmul.f32 1.0, %v733
        %v735 = vrcp.pop %v551
        %v736 = vmul.f32 %v551, %v735
        %v737 = vsub.f32 1.0, %v736
        %v738 = vmul.f32 %v735, %v737
        %v739 = vadd.f32 %v735, %v738
        %vm740 = vweird.f32 %v551
        %vm741 = vweird.f32 %v735
        %vm742 = vmor %vm740, %vm741
        %v743 = vsel %vm742, %v735, %v739
        %v744 = vand.u32 2147483647, %v551
        %vm745 = vcmp.eq.f32.partialorder %v744, 8.507059e+37
        %v746 = vand.u32 %v551, 2147483648
        %v747 = vor.u32 1.1754944e-38, %v746
        %v748 = vsel %vm745, %v747, %v743
        %v749 = vmul.f32 1.0, %v748
        %v750 = vrcp.pop %v552
        %v751 = vmul.f32 %v552, %v750
        %v752 = vsub.f32 1.0, %v751
        %v753 = vmul.f32 %v750, %v752
        %v754 = vadd.f32 %v750, %v753
        %vm755 = vweird.f32 %v552
        %vm756 = vweird.f32 %v750
        %vm757 = vmor %vm755, %vm756
        %v758 = vsel %vm757, %v750, %v754
        %v759 = vand.u32 2147483647, %v552
        %vm760 = vcmp.eq.f32.partialorder %v759, 8.507059e+37
        %v761 = vand.u32 %v552, 2147483648
        %v762 = vor.u32 1.1754944e-38, %v761
        %v763 = vsel %vm760, %v762, %v758
        %v764 = vmul.f32 1.0, %v763
        %v765 = vrcp.pop %v553
        %v766 = vmul.f32 %v553, %v765
        %v767 = vsub.f32 1.0, %v766
        %v768 = vmul.f32 %v765, %v767
        %v769 = vadd.f32 %v765, %v768
        %vm770 = vweird.f32 %v553
        %vm771 = vweird.f32 %v765
        %vm772 = vmor %vm770, %vm771
        %v773 = vsel %vm772, %v765, %v769
        %v774 = vand.u32 2147483647, %v553
        %vm775 = vcmp.eq.f32.partialorder %v774, 8.507059e+37
        %v776 = vand.u32 %v553, 2147483648
        %v777 = vor.u32 1.1754944e-38, %v776
        %v778 = vsel %vm775, %v777, %v773
        %v779 = vmul.f32 1.0, %v778
        %v780 = vrcp.pop %v554
        %v781 = vmul.f32 %v554, %v780
        %v782 = vsub.f32 1.0, %v781
        %v783 = vmul.f32 %v780, %v782
        %v784 = vadd.f32 %v780, %v783
        %vm785 = vweird.f32 %v554
        %vm786 = vweird.f32 %v780
        %vm787 = vmor %vm785, %vm786
        %v788 = vsel %vm787, %v780, %v784
        %v789 = vand.u32 2147483647, %v554
        %vm790 = vcmp.eq.f32.partialorder %v789, 8.507059e+37
        %v791 = vand.u32 %v554, 2147483648
        %v792 = vor.u32 1.1754944e-38, %v791
        %v793 = vsel %vm790, %v792, %v788
        %v794 = vmul.f32 1.0, %v793
        %v795 = vlaneseq
        %v796 = vand.u32 %v795, 127
        %v797 = vadd.s32 %v796, 128
        %798 = vrot.lane.b32.xlu0 %v483, 1
        %v799 = vpop.permute.xlu0 %798
        %800 = vrot.lane.b32.xlu0 %v485, 1
        %v801 = vpop.permute.xlu0 %800
        %802 = vrot.lane.b32.xlu0 %v487, 1
        %v803 = vpop.permute.xlu0 %802
        %804 = vrot.lane.b32.xlu0 %v489, 1
        %v805 = vpop.permute.xlu0 %804
        %806 = vrot.lane.b32.xlu0 %v484, 1
        %v807 = vpop.permute.xlu0 %806
        %808 = vrot.lane.b32.xlu0 %v486, 1
        %v809 = vpop.permute.xlu0 %808
        %810 = vrot.lane.b32.xlu0 %v488, 1
        %v811 = vpop.permute.xlu0 %810
        %812 = vrot.lane.b32.xlu0 %v490, 1
        %v813 = vpop.permute.xlu0 %812
        %vm814 = vcmp.lt.s32.totalorder %v796, 1
        %v815 = vsel %vm814, %v799, %v807
        %v816 = vsel %vm814, %v801, %v809
        %v817 = vsel %vm814, %v803, %v811
        %v818 = vsel %vm814, %v805, %v813
        %v819 = vsel %vm814, %v807, %v799
        %v820 = vsel %vm814, %v809, %v801
        %v821 = vsel %vm814, %v811, %v803
        %v822 = vsel %vm814, %v813, %v805
        %vm823 = vcmp.lt.s32.totalorder %v797, 1
        %v824 = vsel %vm814, 0.0, %v819
        %v825 = vsel %vm823, 0.0, %v815
        %v826 = vsel %vm814, 0.0, %v820
        %v827 = vsel %vm823, 0.0, %v816
        %v828 = vsel %vm814, 0.0, %v821
        %v829 = vsel %vm823, 0.0, %v817
        %v830 = vsel %vm814, 0.0, %v822
        %v831 = vsel %vm823, 0.0, %v818
        %832 = vrot.lane.b32.xlu0 %v483, 127
        %v833 = vpop.permute.xlu0 %832
        %834 = vrot.lane.b32.xlu0 %v485, 127
        %v835 = vpop.permute.xlu0 %834
        %836 = vrot.lane.b32.xlu0 %v487, 127
        %v837 = vpop.permute.xlu0 %836
        %838 = vrot.lane.b32.xlu0 %v489, 127
        %v839 = vpop.permute.xlu0 %838
        %840 = vrot.lane.b32.xlu0 %v484, 127
        %v841 = vpop.permute.xlu0 %840
        %842 = vrot.lane.b32.xlu0 %v486, 127
        %v843 = vpop.permute.xlu0 %842
        %844 = vrot.lane.b32.xlu0 %v488, 127
        %v845 = vpop.permute.xlu0 %844
        %846 = vrot.lane.b32.xlu0 %v490, 127
        %v847 = vpop.permute.xlu0 %846
        %vm848 = vcmp.lt.s32.totalorder %v796, 127
        %v849 = vsel %vm848, %v833, %v841
        %v850 = vsel %vm848, %v835, %v843
        %v851 = vsel %vm848, %v837, %v845
        %v852 = vsel %vm848, %v839, %v847
        %v853 = vsel %vm848, %v841, %v833
        %v854 = vsel %vm848, %v843, %v835
        %v855 = vsel %vm848, %v845, %v837
        %v856 = vsel %vm848, %v847, %v839
        %vm857 = vcmp.ge.s32.totalorder %v796, 255
        %vm858 = vcmp.ge.s32.totalorder %v797, 255
        %v859 = vsel %vm857, 0.0, %v849
        %v860 = vsel %vm858, 0.0, %v853
        %v861 = vsel %vm857, 0.0, %v850
        %v862 = vsel %vm858, 0.0, %v854
        %v863 = vsel %vm857, 0.0, %v851
        %v864 = vsel %vm858, 0.0, %v855
        %v865 = vsel %vm857, 0.0, %v852
        %v866 = vsel %vm858, 0.0, %v856
        %v867 = vld [vmem:[#allocation2] sm:$0xff]
        %v868 = vld [vmem:[#allocation2 + $0x8] sm:$0xff]
        %v869 = vld [vmem:[#allocation2 + $0x10] sm:$0xff]
        %v870 = vld [vmem:[#allocation2 + $0x18] sm:$0xff]
        %v871 = vld [vmem:[#allocation2 + $0x20] sm:$0xff]
        %v872 = vld [vmem:[#allocation2 + $0x28] sm:$0xff]
        %v873 = vld [vmem:[#allocation2 + $0x30] sm:$0xff]
        %v874 = vld [vmem:[#allocation2 + $0x38] sm:$0xff]
        %v875 = vld [vmem:[%s4] sm:$0xff]
        %v876 = vld [vmem:[%s4 + $0x8] sm:$0xff]
        %v877 = vld [vmem:[%s4 + $0x10] sm:$0xff]
        %v878 = vld [vmem:[%s4 + $0x18] sm:$0xff]
        %v879 = vld [vmem:[%s4 + $0x20] sm:$0xff]
        %v880 = vld [vmem:[%s4 + $0x28] sm:$0xff]
        %v881 = vld [vmem:[%s4 + $0x30] sm:$0xff]
        %v882 = vld [vmem:[%s4 + $0x38] sm:$0xff]
        %884 = vset.pattern.permute.xlu0 0
        %885 = vperm.xlu0 %884, %v875
        %v886 = vpop.permute.xlu0 %885
        %889 = vset.pattern.permute.xlu0 0
        %890 = vperm.xlu0 %889, %v876
        %v891 = vpop.permute.xlu0 %890
        %894 = vset.pattern.permute.xlu0 0
        %895 = vperm.xlu0 %894, %v877
        %v896 = vpop.permute.xlu0 %895
        %899 = vset.pattern.permute.xlu0 0
        %900 = vperm.xlu0 %899, %v878
        %v901 = vpop.permute.xlu0 %900
        %904 = vset.pattern.permute.xlu0 0
        %905 = vperm.xlu0 %904, %v879
        %v906 = vpop.permute.xlu0 %905
        %909 = vset.pattern.permute.xlu0 0
        %910 = vperm.xlu0 %909, %v880
        %v911 = vpop.permute.xlu0 %910
        %914 = vset.pattern.permute.xlu0 0
        %915 = vperm.xlu0 %914, %v881
        %v916 = vpop.permute.xlu0 %915
        %919 = vset.pattern.permute.xlu0 0
        %920 = vperm.xlu0 %919, %v882
        %v921 = vpop.permute.xlu0 %920
        %vm923 = vcmask 785408
        %v925 = vsel %vm923, %v867, 0
        %v928 = vsel %vm923, %v868, 0
        %v931 = vsel %vm923, %v869, 0
        %v934 = vsel %vm923, %v870, 0
        %v937 = vsel %vm923, %v871, 0
        %v940 = vsel %vm923, %v872, 0
        %v943 = vsel %vm923, %v873, 0
        %v946 = vsel %vm923, %v874, 0
        %948 = vmatpush.msra.mxu0 0.0
        %949 = vmatpush.msra.mxu0 0.0
        %950 = vmatpush.msra.mxu0 0.0
        %951 = vmatpush.msra.mxu0 0.0
        %952 = vmatpush.msra.mxu0 %v865
        %953 = vmatpush.msra.mxu0 %v863
        %954 = vmatpush.msra.mxu0 %v861
        %955 = vmatpush.msra.mxu0 %v859
        %956 = vmatpush.msra.mxu0 %v489
        %957 = vmatpush.msra.mxu0 %v487
        %958 = vmatpush.msra.mxu0 %v485
        %959 = vmatpush.msra.mxu0 %v483
        %960 = vmatpush.msra.mxu0 %v830
        %961 = vmatpush.msra.mxu0 %v828
        %962 = vmatpush.msra.mxu0 %v826
        %963 = vmatpush.msra.mxu0 %v824
        %964 = vmatmul.f32.gmra.mxu0 %v925
        %v965 = vpop.f32.mrf.mxu0
        %v966 = vadd.f32 %v886, %v965
        %967 = vmatmul.f32.gmra.mxu0 %v928
        %v968 = vpop.f32.mrf.mxu0
        %v969 = vadd.f32 %v891, %v968
        %970 = vmatmul.f32.gmra.mxu0 %v931
        %v971 = vpop.f32.mrf.mxu0
        %v972 = vadd.f32 %v896, %v971
        %973 = vmatmul.f32.gmra.mxu0 %v934
        %v974 = vpop.f32.mrf.mxu0
        %v975 = vadd.f32 %v901, %v974
        %976 = vmatmul.f32.gmra.mxu0 %v937
        %v977 = vpop.f32.mrf.mxu0
        %v978 = vadd.f32 %v906, %v977
        %979 = vmatmul.f32.gmra.mxu0 %v940
        %v980 = vpop.f32.mrf.mxu0
        %v981 = vadd.f32 %v911, %v980
        %982 = vmatmul.f32.gmra.mxu0 %v943
        %v983 = vpop.f32.mrf.mxu0
        %v984 = vadd.f32 %v916, %v983
        %985 = vmatmul.f32.gmra.mxu0 %v946
        %v986 = vpop.f32.mrf.mxu0
        %v987 = vadd.f32 %v921, %v986
        %988 = vdwg.mxu0
        %989 = vmatpush.msra.mxu0 0.0
        %990 = vmatpush.msra.mxu0 0.0
        %991 = vmatpush.msra.mxu0 0.0
        %992 = vmatpush.msra.mxu0 0.0
        %993 = vmatpush.msra.mxu0 %v866
        %994 = vmatpush.msra.mxu0 %v864
        %995 = vmatpush.msra.mxu0 %v862
        %996 = vmatpush.msra.mxu0 %v860
        %997 = vmatpush.msra.mxu0 %v490
        %998 = vmatpush.msra.mxu0 %v488
        %999 = vmatpush.msra.mxu0 %v486
        %1000 = vmatpush.msra.mxu0 %v484
        %1001 = vmatpush.msra.mxu0 %v831
        %1002 = vmatpush.msra.mxu0 %v829
        %1003 = vmatpush.msra.mxu0 %v827
        %1004 = vmatpush.msra.mxu0 %v825
        %1005 = vmatmul.f32.gmra.mxu0 %v925
        %v1006 = vpop.f32.mrf.mxu0
        %v1007 = vadd.f32 %v886, %v1006
        %1008 = vmatmul.f32.gmra.mxu0 %v928
        %v1009 = vpop.f32.mrf.mxu0
        %v1010 = vadd.f32 %v891, %v1009
        %1011 = vmatmul.f32.gmra.mxu0 %v931
        %v1012 = vpop.f32.mrf.mxu0
        %v1013 = vadd.f32 %v896, %v1012
        %1014 = vmatmul.f32.gmra.mxu0 %v934
        %v1015 = vpop.f32.mrf.mxu0
        %v1016 = vadd.f32 %v901, %v1015
        %1017 = vmatmul.f32.gmra.mxu0 %v937
        %v1018 = vpop.f32.mrf.mxu0
        %v1019 = vadd.f32 %v906, %v1018
        %1020 = vmatmul.f32.gmra.mxu0 %v940
        %v1021 = vpop.f32.mrf.mxu0
        %v1022 = vadd.f32 %v911, %v1021
        %1023 = vmatmul.f32.gmra.mxu0 %v943
        %v1024 = vpop.f32.mrf.mxu0
        %v1025 = vadd.f32 %v916, %v1024
        %1026 = vmatmul.f32.gmra.mxu0 %v946
        %v1027 = vpop.f32.mrf.mxu0
        %v1028 = vadd.f32 %v921, %v1027
        %1029 = vdwg.mxu0
        %v1030 = vmax.f32 %v966, 0.0
        %v1031 = vmax.f32 %v1007, 0.0
        %v1032 = vmax.f32 %v969, 0.0
        %v1033 = vmax.f32 %v1010, 0.0
        %v1034 = vmax.f32 %v972, 0.0
        %v1035 = vmax.f32 %v1013, 0.0
        %v1036 = vmax.f32 %v975, 0.0
        %v1037 = vmax.f32 %v1016, 0.0
        %v1038 = vmax.f32 %v978, 0.0
        %v1039 = vmax.f32 %v1019, 0.0
        %v1040 = vmax.f32 %v981, 0.0
        %v1041 = vmax.f32 %v1022, 0.0
        %v1042 = vmax.f32 %v984, 0.0
        %v1043 = vmax.f32 %v1025, 0.0
        %v1044 = vmax.f32 %v987, 0.0
        %v1045 = vmax.f32 %v1028, 0.0
        %v1046 = vmul.f32 %v240, %v569
        %v1047 = vmul.f32 %v241, %v584
        %v1048 = vmul.f32 %v242, %v599
        %v1049 = vmul.f32 %v243, %v614
        %v1050 = vmul.f32 %v244, %v629
        %v1051 = vmul.f32 %v245, %v644
        %v1052 = vmul.f32 %v246, %v659
        %v1053 = vmul.f32 %v247, %v674
        %v1054 = vmul.f32 %v248, %v689
        %v1055 = vmul.f32 %v249, %v704
        %v1056 = vmul.f32 %v250, %v719
        %v1057 = vmul.f32 %v251, %v734
        %v1058 = vmul.f32 %v252, %v749
        %v1059 = vmul.f32 %v253, %v764
        %v1060 = vmul.f32 %v254, %v779
        %v1061 = vmul.f32 %v255, %v794
        %v1062 = vadd.f32 %v1046, %v1030
        %v1063 = vadd.f32 %v1047, %v1031
        %v1064 = vadd.f32 %v1048, %v1032
        %v1065 = vadd.f32 %v1049, %v1033
        %v1066 = vadd.f32 %v1050, %v1034
        %v1067 = vadd.f32 %v1051, %v1035
        %v1068 = vadd.f32 %v1052, %v1036
        %v1069 = vadd.f32 %v1053, %v1037
        %v1070 = vadd.f32 %v1054, %v1038
        %v1071 = vadd.f32 %v1055, %v1039
        %v1072 = vadd.f32 %v1056, %v1040
        %v1073 = vadd.f32 %v1057, %v1041
        %v1074 = vadd.f32 %v1058, %v1042
        %v1075 = vadd.f32 %v1059, %v1043
        %v1076 = vadd.f32 %v1060, %v1044
        %v1077 = vadd.f32 %v1061, %v1045
        %1078 = vst [vmem:[%s234] sm:$0xff] %v1062
        %1079 = vst [vmem:[%s234 + $0x8] sm:$0xff] %v1063
        %1080 = vst [vmem:[%s234 + $0x10] sm:$0xff] %v1064
        %1081 = vst [vmem:[%s234 + $0x18] sm:$0xff] %v1065
        %1082 = vst [vmem:[%s234 + $0x20] sm:$0xff] %v1066
        %1083 = vst [vmem:[%s234 + $0x28] sm:$0xff] %v1067
        %1084 = vst [vmem:[%s234 + $0x30] sm:$0xff] %v1068
        %1085 = vst [vmem:[%s234 + $0x38] sm:$0xff] %v1069
        %1086 = vst [vmem:[%s234 + $0x40] sm:$0xff] %v1070
        %1087 = vst [vmem:[%s234 + $0x48] sm:$0xff] %v1071
        %1088 = vst [vmem:[%s234 + $0x50] sm:$0xff] %v1072
        %1089 = vst [vmem:[%s234 + $0x58] sm:$0xff] %v1073
        %1090 = vst [vmem:[%s234 + $0x60] sm:$0xff] %v1074
        %1091 = vst [vmem:[%s234 + $0x68] sm:$0xff] %v1075
        %1092 = vst [vmem:[%s234 + $0x70] sm:$0xff] %v1076
        %1093 = vst [vmem:[%s234 + $0x78] sm:$0xff] %v1077
        %s1094 = sand.u32 %s138, 1
        %s1095 = scalar_lea.sflag [#allocation4], %s1094
        %s1096 = sand.u32 %s138, 1
        %s1097 = smul.addr %s1096, 128
        %s1098 = scalar_lea.vmem [#allocation5], %s1097
        // Predicated region
        $region45: #{tpu_custom_call.1} parent=39 // pred_check
          %p1099 = pneg %p148
        $region46: #{tpu_custom_call.1} parent=39 // pred_check_branch
          %1101 = sbr.rel (%p1099) target = $region48
        $region47: #{tpu_custom_call.1} parent=39 // pred_region
          %1103 = vsyncadd %s1095, 0
          %s1104 = smul.addr %s20, 16
          %s1105 = smul.addr %s1104, 8
          %s1106 = scalar_lea.hbm %s5, %s1105
          %s1107 = sshll.u32 %s1098, 4
          %s1108 = int_to_ptr.vmem [resolvable:$true] %s1107
          %s1109 = sshll.u32 %s1106, 4
          %s1110 = int_to_ptr.hbm [resolvable:$true] %s1109
          %1115 = dma.vmem_to_hbm [thread:$0]  %s1108, 2048, %s1110, %s1095, 256, 256, 16
        $region48: #{tpu_custom_call.1} parent=39 // pred_fallthru
          _
      $region40: #{tpu_custom_call.1} parent=5 // pred_fallthru
        _
      %p1116 = scmp.le.s32.totalorder 2, %s15
      // Predicated region
      $region49: #{tpu_custom_call.1} parent=5 // pred_check
        %p1117 = pneg %p1116
      $region50: #{tpu_custom_call.1} parent=5 // pred_check_branch
        %1119 = sbr.rel (%p1117) target = $region52
      $region51: #{tpu_custom_call.1} parent=5 // pred_region
        %s1120 = ssub.s32 %s15, 2
        // Predicated region
        $region53: #{tpu_custom_call.1} parent=51 // pred_check
          %p1121 = pneg %p154
        $region54: #{tpu_custom_call.1} parent=51 // pred_check_branch
          %1123 = sbr.rel (%p1121) target = $region56
        $region55: #{tpu_custom_call.1} parent=51 // pred_region
          %s1124 = sand.u32 %s139, 1
          %s1125 = scalar_lea.sflag [#allocation4], %s1124
          %s1126 = sand.u32 %s139, 1
          %s1127 = smul.addr %s1126, 128
          %s1128 = scalar_lea.vmem [#allocation5], %s1127
          %1130 = dma.done %s1125, 2048
        $region56: #{tpu_custom_call.1} parent=51 // pred_fallthru
          _
      $region52: #{tpu_custom_call.1} parent=5 // pred_fallthru
        _
    $region6: #{tpu_custom_call.1} parent=1 // loop_footer
      %s19 = sadd.s32 1, %s15
    $region7: #{tpu_custom_call.1} parent=1 // loop_footer_branch
      %14 = sbr.rel target = $region3
    $region8: #{tpu_custom_call.1} parent=1 // loop_exit
      _
    %1131 = vsyncpa [#allocation3], 1
    %s1132 = scalar_lea.sflag [#allocation3], 1
    %1133 = vsyncpa %s1132, 1
    %1134 = vsyncpa [#allocation4], 1
    %s1135 = scalar_lea.sflag [#allocation4], 1
    %1136 = vsyncpa %s1135, 1

</llo_original>
